<compile_context>
chip_gen: v7x
topology: tpu7x:2x2x1
jax: 0.10.0
libtpu: 0.0.40
codegen_flags: <defaults>
</compile_context>

<pallas_src>
import math
import functools

import jax
import jax.numpy as jnp
import numpy as np
from jax import lax
from jax.experimental import pallas as pl
from jax.experimental.pallas import tpu as pltpu


# ---------------------------------------------------------------------------
# helpers
# ---------------------------------------------------------------------------
def _layer_norm(x, w, b, eps):
    m = jnp.mean(x, axis=-1, keepdims=True)
    v = jnp.mean((x - m) ** 2, axis=-1, keepdims=True)
    return (x - m) * jax.lax.rsqrt(v + eps) * w + b


def _replicated_spec(shape):
    """Full-array block, same for every grid step (shared weights)."""
    ndim = len(shape)

    def imap(*_):
        return (0,) * ndim

    return pl.BlockSpec(shape, imap)


def _per_layer_spec(stacked_shape):
    """One layer's slice of an [L, ...] stacked weight, streamed along the grid."""
    ndim = len(stacked_shape)

    def imap(l):
        return (l,) + (0,) * (ndim - 1)

    return pl.BlockSpec((1,) + tuple(stacked_shape[1:]), imap)


# ---------------------------------------------------------------------------
# Kernel 1: patch-embedding MLP + cls token + positional encodings
# ---------------------------------------------------------------------------
def _patch_embed_kernel(patch_ref, lnp_w, lnp_b, we1, be1, lne1_w, lne1_b,
                        we2, be2, lne2_w, lne2_b, cls_ref, pos_ref, out_ref,
                        *, eps):
    B, S, H = out_ref.shape
    N = S - 1

    p = patch_ref[...]                                             # [B*N, P] f32
    p = _layer_norm(p, lnp_w[...], lnp_b[...], eps)
    h = jnp.dot(p.astype(jnp.bfloat16), we1[...],
                preferred_element_type=jnp.float32) + be1[...]
    h = _layer_norm(h, lne1_w[...], lne1_b[...], eps)
    h = jnp.maximum(h, 0.0)
    h = jnp.dot(h.astype(jnp.bfloat16), we2[...],
                preferred_element_type=jnp.float32) + be2[...]
    h = _layer_norm(h, lne2_w[...], lne2_b[...], eps)              # [B*N, H] f32

    pos = pos_ref[...]                                             # [S, H]
    cls_row = cls_ref[...] + pos[0:1, :]                           # [1, H]
    pos_patch = pos[1:, :]                                         # [N, H]

    for b in range(B):                                             # static, tiny B
        h_b = h[b * N:(b + 1) * N, :]                              # [N, H]
        tile = jnp.concatenate([cls_row, h_b + pos_patch], axis=0)  # [S, H]
        out_ref[b] = tile                                          # single aligned store


def patch_embed(patches, ep, pos, *, eps=1e-5):
    B, N, P = patches.shape
    H = ep["we1"].shape[1]
    S = N + 1
    patches2 = patches.reshape(B * N, P)
    weights = [ep["lnp_w"], ep["lnp_b"], ep["we1"], ep["be1"],
               ep["lne1_w"], ep["lne1_b"], ep["we2"], ep["be2"],
               ep["lne2_w"], ep["lne2_b"], ep["cls"], pos]
    in_specs = [pl.BlockSpec((B * N, P), lambda i: (0, 0))]
    in_specs += [_replicated_spec(w.shape) for w in weights]
    return pl.pallas_call(
        functools.partial(_patch_embed_kernel, eps=eps),
        out_shape=jax.ShapeDtypeStruct((B, S, H), jnp.float32),
        grid=(1,),
        in_specs=in_specs,
        out_specs=pl.BlockSpec((B, S, H), lambda i: (0, 0, 0)),
        compiler_params=pltpu.CompilerParams(
            dimension_semantics=("arbitrary",)),
    )(patches2, *weights)


# ---------------------------------------------------------------------------
# Kernel 2: the full encoder stack (all layers fused, batch folded inside)
# ---------------------------------------------------------------------------
def _encoder_stack_kernel(x_ref, wqkv_ref, bqkv_ref, wo_ref, bo_ref,
                          ln1w_ref, ln1b_ref, w1_ref, b1_ref, w2_ref, b2_ref,
                          ln2w_ref, ln2b_ref, out_ref, act_ref,
                          *, n_heads, head_dim, eps):
    layer = pl.program_id(0)
    n_layers = pl.num_programs(0)

    # load the activation into the resident VMEM scratch on the first layer only
    @pl.when(layer == 0)
    def _():
        act_ref[...] = x_ref[...]

    B, S, H = act_ref.shape
    hd = head_dim
    inv_scale = 1.0 / math.sqrt(hd)

    wqkv = wqkv_ref[0]                                             # [H, 3H]  bf16
    bqkv = bqkv_ref[0]                                             # [1, 3H]  f32
    wo = wo_ref[0]                                                 # [H, H]   bf16
    bo = bo_ref[0]                                                 # [1, H]   f32
    ln1w, ln1b = ln1w_ref[0], ln1b_ref[0]
    w1, b1 = w1_ref[0], b1_ref[0]                                  # [H, pf] bf16 / [1, pf]
    w2, b2 = w2_ref[0], b2_ref[0]                                  # [pf, H] bf16 / [1, H]
    ln2w, ln2b = ln2w_ref[0], ln2b_ref[0]

    for b in range(B):                                             # static, tiny B
        x2 = act_ref[b]                                            # [S, H] f32
        xb = x2.astype(jnp.bfloat16)

        # ---- fused QKV projection: one K=H, N=3H matmul -------------------
        qkv = jnp.dot(xb, wqkv, preferred_element_type=jnp.float32) + bqkv  # [S, 3H]

        # ---- per-head attention (score/ctx matmuls are inherently K=hd/K=S)
        ctx_heads = []
        for h in range(n_heads):                                   # static, tiny nh
            q_h = qkv[:, h * hd:(h + 1) * hd]                      # [S, hd]
            k_h = qkv[:, H + h * hd: H + (h + 1) * hd]             # [S, hd]
            v_h = qkv[:, 2 * H + h * hd: 2 * H + (h + 1) * hd]     # [S, hd]
            s = lax.dot_general(q_h, k_h, (((1,), (1,)), ((), ())),
                                preferred_element_type=jnp.float32) * inv_scale
            s = s - jnp.max(s, axis=-1, keepdims=True)
            p_ = jnp.exp(s)
            alpha = p_ * pl.reciprocal(jnp.sum(p_, axis=-1, keepdims=True),
                                       approx=True)
            ctx_heads.append(jnp.dot(alpha, v_h,
                                     preferred_element_type=jnp.float32))
        ctx = jnp.concatenate(ctx_heads, axis=-1)                  # [S, H]

        # ---- fused output projection: one K=H matmul -----------------------
        attn = jnp.dot(ctx.astype(jnp.bfloat16), wo,
                       preferred_element_type=jnp.float32) + bo    # [S, H]

        # ---- residual + LayerNorm 1 ----------------------------------------
        x1 = _layer_norm(x2 + attn, ln1w, ln1b, eps)

        # ---- feed-forward ----------------------------------------------------
        hmid = jnp.maximum(
            jnp.dot(x1.astype(jnp.bfloat16), w1,
                    preferred_element_type=jnp.float32) + b1, 0.0)
        ff = jnp.dot(hmid.astype(jnp.bfloat16), w2,
                     preferred_element_type=jnp.float32) + b2

        # ---- residual + LayerNorm 2 -----------------------------------------
        y = _layer_norm(x1 + ff, ln2w, ln2b, eps)

        act_ref[b] = y                                             # carry to next layer

    @pl.when(layer == n_layers - 1)
    def _():
        out_ref[...] = act_ref[...]


def encoder_stack(x, sp, *, n_heads, eps=1e-5):
    B, S, H = x.shape
    L = sp["wqkv"].shape[0]
    head_dim = H // n_heads
    weights = [sp["wqkv"], sp["bqkv"], sp["wo"], sp["bo"],
               sp["ln1w"], sp["ln1b"], sp["w1"], sp["b1"],
               sp["w2"], sp["b2"], sp["ln2w"], sp["ln2b"]]
    in_specs = [pl.BlockSpec((B, S, H), lambda l: (0, 0, 0))]
    in_specs += [_per_layer_spec(w.shape) for w in weights]
    return pl.pallas_call(
        functools.partial(_encoder_stack_kernel,
                          n_heads=n_heads, head_dim=head_dim, eps=eps),
        out_shape=jax.ShapeDtypeStruct((B, S, H), jnp.float32),
        grid=(L,),
        in_specs=in_specs,
        out_specs=pl.BlockSpec((B, S, H), lambda l: (0, 0, 0)),
        scratch_shapes=[pltpu.VMEM((B, S, H), jnp.float32)],
        compiler_params=pltpu.CompilerParams(
            dimension_semantics=("arbitrary",),
            vmem_limit_bytes=32 * 1024 * 1024),
    )(x, *weights)


# ---------------------------------------------------------------------------
# Host-side glue: patching, positional encodings, parameter init / packing
# ---------------------------------------------------------------------------
def to_patches(image, *, channels, image_size, patch_size):
    """Exact clone of the PyTorch `to_patch` lambda (view -> permute -> reshape)."""
    B = image.shape[0]
    g = image_size // patch_size
    x = image.reshape(B, channels, g, patch_size, g, patch_size)
    x = x.transpose(0, 2, 4, 1, 3, 5)
    return x.reshape(B, g * g, channels * patch_size * patch_size)


def positional_encoding(seq_len, hid_dim):
    pos = jnp.arange(seq_len, dtype=jnp.float32)[:, None]
    div = jnp.exp(-jnp.arange(0, hid_dim, 2, dtype=jnp.float32)
                  * math.log(10000.0) / hid_dim)
    pe = jnp.zeros((seq_len, hid_dim), jnp.float32)
    pe = pe.at[:, 0::2].set(jnp.sin(pos * div))
    pe = pe.at[:, 1::2].set(jnp.cos(pos * div))
    return pe


def init_linear(key, fan_in, fan_out):
    kw, kb = jax.random.split(key)
    bound = 1.0 / math.sqrt(fan_in)
    w = jax.random.uniform(kw, (fan_in, fan_out), jnp.float32, -bound, bound)
    b = jax.random.uniform(kb, (fan_out,), jnp.float32, -bound, bound)
    return w, b


def init_layer_params(key, hid_dim, pf_dim):
    ks = jax.random.split(key, 6)
    p = {}
    p["wq"], p["bq"] = init_linear(ks[0], hid_dim, hid_dim)
    p["wk"], p["bk"] = init_linear(ks[1], hid_dim, hid_dim)
    p["wv"], p["bv"] = init_linear(ks[2], hid_dim, hid_dim)
    p["wo"], p["bo"] = init_linear(ks[3], hid_dim, hid_dim)
    p["w1"], p["b1"] = init_linear(ks[4], hid_dim, pf_dim)
    p["w2"], p["b2"] = init_linear(ks[5], pf_dim, hid_dim)
    p["ln1w"] = jnp.ones((hid_dim,), jnp.float32)
    p["ln1b"] = jnp.zeros((hid_dim,), jnp.float32)
    p["ln2w"] = jnp.ones((hid_dim,), jnp.float32)
    p["ln2b"] = jnp.zeros((hid_dim,), jnp.float32)
    return p


def init_base_params(key, *, patch_dim, hid_dim, pf_dim, n_layers):
    keys = jax.random.split(key, 3 + n_layers)
    base = {}
    base["lnp_w"] = jnp.ones((patch_dim,), jnp.float32)
    base["lnp_b"] = jnp.zeros((patch_dim,), jnp.float32)
    base["we1"], base["be1"] = init_linear(keys[0], patch_dim, hid_dim)
    base["lne1_w"] = jnp.ones((hid_dim,), jnp.float32)
    base["lne1_b"] = jnp.zeros((hid_dim,), jnp.float32)
    base["we2"], base["be2"] = init_linear(keys[1], hid_dim, hid_dim)
    base["lne2_w"] = jnp.ones((hid_dim,), jnp.float32)
    base["lne2_b"] = jnp.zeros((hid_dim,), jnp.float32)
    base["cls"] = jax.random.normal(keys[2], (1, 1, hid_dim), jnp.float32)
    base["layers"] = [init_layer_params(keys[3 + i], hid_dim, pf_dim)
                      for i in range(n_layers)]
    return base


def make_embed_kernel_params(base):
    """Kernel-ready patch-embed params: 2-D biases/LN params, bf16 matmul weights."""
    r = lambda a: a.reshape(1, -1)
    return {
        "lnp_w": r(base["lnp_w"]), "lnp_b": r(base["lnp_b"]),
        "we1": base["we1"].astype(jnp.bfloat16), "be1": r(base["be1"]),
        "lne1_w": r(base["lne1_w"]), "lne1_b": r(base["lne1_b"]),
        "we2": base["we2"].astype(jnp.bfloat16), "be2": r(base["be2"]),
        "lne2_w": r(base["lne2_w"]), "lne2_b": r(base["lne2_b"]),
        "cls": base["cls"].reshape(1, -1),
    }


def stack_encoder_params(layers):
    """Stack per-layer weights along a leading L axis.

    QKV is fused into a single [H, 3H] matrix (lane-dense N=3H matmul); the
    output projection keeps its original [H, H] orientation (K=H matmul).
    Matmul weights are stored in bfloat16; biases / LayerNorm params stay f32.
    """
    H = layers[0]["wq"].shape[0]
    sp = {}
    sp["wqkv"] = jnp.stack([
        jnp.concatenate([p["wq"], p["wk"], p["wv"]], axis=1) for p in layers
    ]).astype(jnp.bfloat16)                                         # [L, H, 3H]
    sp["bqkv"] = jnp.stack([
        jnp.concatenate([p["bq"], p["bk"], p["bv"]]).reshape(1, 3 * H)
        for p in layers])                                           # [L, 1, 3H]
    sp["wo"] = jnp.stack([p["wo"] for p in layers]).astype(jnp.bfloat16)  # [L, H, H]
    sp["bo"] = jnp.stack([p["bo"].reshape(1, H) for p in layers])
    sp["ln1w"] = jnp.stack([p["ln1w"].reshape(1, H) for p in layers])
    sp["ln1b"] = jnp.stack([p["ln1b"].reshape(1, H) for p in layers])
    sp["w1"] = jnp.stack([p["w1"] for p in layers]).astype(jnp.bfloat16)  # [L, H, pf]
    sp["b1"] = jnp.stack([p["b1"].reshape(1, -1) for p in layers])
    sp["w2"] = jnp.stack([p["w2"] for p in layers]).astype(jnp.bfloat16)  # [L, pf, H]
    sp["b2"] = jnp.stack([p["b2"].reshape(1, H) for p in layers])
    sp["ln2w"] = jnp.stack([p["ln2w"].reshape(1, H) for p in layers])
    sp["ln2b"] = jnp.stack([p["ln2b"].reshape(1, H) for p in layers])
    return sp


def image_representations(image, embed_p, stacked_p, pos, *, channels,
                          image_size, patch_size, n_heads):
    patches = to_patches(image, channels=channels,
                         image_size=image_size, patch_size=patch_size)
    x = patch_embed(patches, embed_p, pos)
    x = encoder_stack(x, stacked_p, n_heads=n_heads)
    return x


# ---------------------------------------------------------------------------
# Plain-JAX reference (mirrors the PyTorch module, f32 end-to-end)
# ---------------------------------------------------------------------------
def reference(image, base, pos, *, channels, image_size, patch_size,
              n_heads, eps=1e-5):
    B = image.shape[0]
    x = to_patches(image, channels=channels, image_size=image_size,
                   patch_size=patch_size)
    x = _layer_norm(x, base["lnp_w"], base["lnp_b"], eps)
    x = x @ base["we1"] + base["be1"]
    x = _layer_norm(x, base["lne1_w"], base["lne1_b"], eps)
    x = jnp.maximum(x, 0.0)
    x = x @ base["we2"] + base["be2"]
    x = _layer_norm(x, base["lne2_w"], base["lne2_b"], eps)
    H = x.shape[-1]
    cls = jnp.broadcast_to(base["cls"], (B, 1, H))
    x = jnp.concatenate([cls, x], axis=1)
    S = x.shape[1]
    x = x + pos[None, :, :]
    hd = H // n_heads
    for lp in base["layers"]:
        q = (x @ lp["wq"] + lp["bq"]).reshape(B, S, n_heads, hd).transpose(0, 2, 1, 3)
        k = (x @ lp["wk"] + lp["bk"]).reshape(B, S, n_heads, hd).transpose(0, 2, 1, 3)
        v = (x @ lp["wv"] + lp["bv"]).reshape(B, S, n_heads, hd).transpose(0, 2, 1, 3)
        sc = jnp.einsum("bhqd,bhkd->bhqk", q, k) / math.sqrt(hd)
        al = jax.nn.softmax(sc, axis=-1)
        a = jnp.einsum("bhqk,bhkd->bhqd", al, v).transpose(0, 2, 1, 3).reshape(B, S, H)
        a = a @ lp["wo"] + lp["bo"]
        x1 = _layer_norm(x + a, lp["ln1w"], lp["ln1b"], eps)
        ff = jnp.maximum(x1 @ lp["w1"] + lp["b1"], 0.0) @ lp["w2"] + lp["b2"]
        x = _layer_norm(x1 + ff, lp["ln2w"], lp["ln2b"], eps)
    return x


if __name__ == "__main__":
    # small but lane-dense config consistent with the module
    B = 2
    channels = 4
    image_size = 16
    patch_size = 4
    hid_dim = 128
    n_heads = 4
    pf_dim = 256
    n_layers = 2

    g = image_size // patch_size
    num_patches = g * g                               # 16
    patch_dim = channels * patch_size * patch_size    # 64
    seq_len = num_patches + 1                         # 17 (cls token + patches)

    key = jax.random.PRNGKey(0)
    k_img, k_param = jax.random.split(key)

    base = init_base_params(k_param, patch_dim=patch_dim, hid_dim=hid_dim,
                            pf_dim=pf_dim, n_layers=n_layers)
    embed_p = make_embed_kernel_params(base)
    stacked_p = stack_encoder_params(base["layers"])
    pos = positional_encoding(seq_len, hid_dim)

    image = jax.random.normal(k_img, (B, channels, image_size, image_size),
                              jnp.float32)

    out = image_representations(image, embed_p, stacked_p, pos,
                                channels=channels, image_size=image_size,
                                patch_size=patch_size, n_heads=n_heads)
    out = jax.block_until_ready(out)

    ref = jax.block_until_ready(
        reference(image, base, pos, channels=channels, image_size=image_size,
                  patch_size=patch_size, n_heads=n_heads))

    assert out.shape == (B, seq_len, hid_dim)
    # bf16 weight/activation streaming in the kernels vs a pure-f32 reference:
    # mixed-precision tolerance.
    np.testing.assert_allclose(np.asarray(out), np.asarray(ref),
                               rtol=2.5e-2, atol=2.5e-2)
    print("KERNEL_OK")
</pallas_src>

<mosaic_0001>
module attributes {stable_mosaic.version = 11 : i64} {
  func.func @_patch_embed_kernel(%arg0: i32, %arg1: memref<32x64xf32, #tpu.memory_space<vmem>>, %arg2: memref<1x64xf32, #tpu.memory_space<vmem>>, %arg3: memref<1x64xf32, #tpu.memory_space<vmem>>, %arg4: memref<64x128xbf16, #tpu.memory_space<vmem>>, %arg5: memref<1x128xf32, #tpu.memory_space<vmem>>, %arg6: memref<1x128xf32, #tpu.memory_space<vmem>>, %arg7: memref<1x128xf32, #tpu.memory_space<vmem>>, %arg8: memref<128x128xbf16, #tpu.memory_space<vmem>>, %arg9: memref<1x128xf32, #tpu.memory_space<vmem>>, %arg10: memref<1x128xf32, #tpu.memory_space<vmem>>, %arg11: memref<1x128xf32, #tpu.memory_space<vmem>>, %arg12: memref<1x128xf32, #tpu.memory_space<vmem>>, %arg13: memref<17x128xf32, #tpu.memory_space<vmem>>, %arg14: memref<2x17x128xf32, #tpu.memory_space<vmem>>) attributes {dimension_semantics = [#tpu.dimension_semantics<arbitrary>], iteration_bounds = array<i64: 1>, scalar_prefetch = 0 : i64, scratch_operands = 0 : i64, tpu.core_type = #tpu.core_type<tc>, window_params = [{pipeline_mode = #tpu.pipeline_mode<synchronous>, transform_indices = @transform_0, window_bounds = array<i64: 32, 64>}, {pipeline_mode = #tpu.pipeline_mode<synchronous>, transform_indices = @transform_1, window_bounds = array<i64: 1, 64>}, {pipeline_mode = #tpu.pipeline_mode<synchronous>, transform_indices = @transform_2, window_bounds = array<i64: 1, 64>}, {pipeline_mode = #tpu.pipeline_mode<synchronous>, transform_indices = @transform_3, window_bounds = array<i64: 64, 128>}, {pipeline_mode = #tpu.pipeline_mode<synchronous>, transform_indices = @transform_4, window_bounds = array<i64: 1, 128>}, {pipeline_mode = #tpu.pipeline_mode<synchronous>, transform_indices = @transform_5, window_bounds = array<i64: 1, 128>}, {pipeline_mode = #tpu.pipeline_mode<synchronous>, transform_indices = @transform_6, window_bounds = array<i64: 1, 128>}, {pipeline_mode = #tpu.pipeline_mode<synchronous>, transform_indices = @transform_7, window_bounds = array<i64: 128, 128>}, {pipeline_mode = #tpu.pipeline_mode<synchronous>, transform_indices = @transform_8, window_bounds = array<i64: 1, 128>}, {pipeline_mode = #tpu.pipeline_mode<synchronous>, transform_indices = @transform_9, window_bounds = array<i64: 1, 128>}, {pipeline_mode = #tpu.pipeline_mode<synchronous>, transform_indices = @transform_10, window_bounds = array<i64: 1, 128>}, {pipeline_mode = #tpu.pipeline_mode<synchronous>, transform_indices = @transform_11, window_bounds = array<i64: 1, 128>}, {pipeline_mode = #tpu.pipeline_mode<synchronous>, transform_indices = @transform_12, window_bounds = array<i64: 17, 128>}, {pipeline_mode = #tpu.pipeline_mode<synchronous>, transform_indices = @transform_13, window_bounds = array<i64: 2, 17, 128>}]} {
    %c0 = arith.constant 0 : index
    %c0_0 = arith.constant 0 : index
    %0 = vector.load %arg1[%c0, %c0_0] : memref<32x64xf32, #tpu.memory_space<vmem>>, vector<32x64xf32>
    %c0_1 = arith.constant 0 : index
    %c0_2 = arith.constant 0 : index
    %1 = vector.load %arg2[%c0_1, %c0_2] : memref<1x64xf32, #tpu.memory_space<vmem>>, vector<1x64xf32>
    %c0_3 = arith.constant 0 : index
    %c0_4 = arith.constant 0 : index
    %2 = vector.load %arg3[%c0_3, %c0_4] : memref<1x64xf32, #tpu.memory_space<vmem>>, vector<1x64xf32>
    %cst = arith.constant dense<0.000000e+00> : vector<32xf32>
    %3 = vector.multi_reduction <add>, %0, %cst [1] : vector<32x64xf32> to vector<32xf32>
    %4 = vector.shape_cast %3 : vector<32xf32> to vector<32x1xf32>
    %cst_5 = arith.constant 6.400000e+01 : f32
    %5 = vector.broadcast %cst_5 : f32 to vector<32x1xf32>
    %6 = arith.divf %4, %5 : vector<32x1xf32>
    %7 = vector.broadcast %6 : vector<32x1xf32> to vector<32x64xf32>
    %8 = arith.subf %0, %7 : vector<32x64xf32>
    %9 = arith.mulf %8, %8 : vector<32x64xf32>
    %cst_6 = arith.constant dense<0.000000e+00> : vector<32xf32>
    %10 = vector.multi_reduction <add>, %9, %cst_6 [1] : vector<32x64xf32> to vector<32xf32>
    %11 = vector.shape_cast %10 : vector<32xf32> to vector<32x1xf32>
    %cst_7 = arith.constant 6.400000e+01 : f32
    %12 = vector.broadcast %cst_7 : f32 to vector<32x1xf32>
    %13 = arith.divf %11, %12 : vector<32x1xf32>
    %14 = vector.broadcast %6 : vector<32x1xf32> to vector<32x64xf32>
    %15 = arith.subf %0, %14 : vector<32x64xf32>
    %cst_8 = arith.constant 9.99999974E-6 : f32
    %16 = vector.broadcast %cst_8 : f32 to vector<32x1xf32>
    %17 = arith.addf %13, %16 : vector<32x1xf32>
    %18 = math.rsqrt %17 : vector<32x1xf32>
    %19 = vector.broadcast %18 : vector<32x1xf32> to vector<32x64xf32>
    %20 = arith.mulf %15, %19 : vector<32x64xf32>
    %21 = vector.broadcast %1 : vector<1x64xf32> to vector<32x64xf32>
    %22 = arith.mulf %20, %21 : vector<32x64xf32>
    %23 = vector.broadcast %2 : vector<1x64xf32> to vector<32x64xf32>
    %24 = arith.addf %22, %23 : vector<32x64xf32>
    %25 = arith.truncf %24 : vector<32x64xf32> to vector<32x64xbf16>
    %c0_9 = arith.constant 0 : index
    %c0_10 = arith.constant 0 : index
    %26 = vector.load %arg4[%c0_9, %c0_10] : memref<64x128xbf16, #tpu.memory_space<vmem>>, vector<64x128xbf16>
    %cst_11 = arith.constant dense<0.000000e+00> : vector<32x128xf32>
    %27 = tpu.matmul %25, %26, %cst_11 {dimension_numbers = #tpu.dot_dimension_numbers<[1], [0], [0], [1], [0, 0, 1, 1], [], []>} : vector<32x64xbf16>, vector<64x128xbf16>, vector<32x128xf32> -> vector<32x128xf32>
    %c0_12 = arith.constant 0 : index
    %c0_13 = arith.constant 0 : index
    %28 = vector.load %arg5[%c0_12, %c0_13] : memref<1x128xf32, #tpu.memory_space<vmem>>, vector<1x128xf32>
    %29 = vector.broadcast %28 : vector<1x128xf32> to vector<32x128xf32>
    %30 = arith.addf %27, %29 : vector<32x128xf32>
    %c0_14 = arith.constant 0 : index
    %c0_15 = arith.constant 0 : index
    %31 = vector.load %arg6[%c0_14, %c0_15] : memref<1x128xf32, #tpu.memory_space<vmem>>, vector<1x128xf32>
    %c0_16 = arith.constant 0 : index
    %c0_17 = arith.constant 0 : index
    %32 = vector.load %arg7[%c0_16, %c0_17] : memref<1x128xf32, #tpu.memory_space<vmem>>, vector<1x128xf32>
    %cst_18 = arith.constant dense<0.000000e+00> : vector<32xf32>
    %33 = vector.multi_reduction <add>, %30, %cst_18 [1] : vector<32x128xf32> to vector<32xf32>
    %34 = vector.shape_cast %33 : vector<32xf32> to vector<32x1xf32>
    %cst_19 = arith.constant 1.280000e+02 : f32
    %35 = vector.broadcast %cst_19 : f32 to vector<32x1xf32>
    %36 = arith.divf %34, %35 : vector<32x1xf32>
    %37 = vector.broadcast %36 : vector<32x1xf32> to vector<32x128xf32>
    %38 = arith.subf %30, %37 : vector<32x128xf32>
    %39 = arith.mulf %38, %38 : vector<32x128xf32>
    %cst_20 = arith.constant dense<0.000000e+00> : vector<32xf32>
    %40 = vector.multi_reduction <add>, %39, %cst_20 [1] : vector<32x128xf32> to vector<32xf32>
    %41 = vector.shape_cast %40 : vector<32xf32> to vector<32x1xf32>
    %cst_21 = arith.constant 1.280000e+02 : f32
    %42 = vector.broadcast %cst_21 : f32 to vector<32x1xf32>
    %43 = arith.divf %41, %42 : vector<32x1xf32>
    %44 = vector.broadcast %36 : vector<32x1xf32> to vector<32x128xf32>
    %45 = arith.subf %30, %44 : vector<32x128xf32>
    %cst_22 = arith.constant 9.99999974E-6 : f32
    %46 = vector.broadcast %cst_22 : f32 to vector<32x1xf32>
    %47 = arith.addf %43, %46 : vector<32x1xf32>
    %48 = math.rsqrt %47 : vector<32x1xf32>
    %49 = vector.broadcast %48 : vector<32x1xf32> to vector<32x128xf32>
    %50 = arith.mulf %45, %49 : vector<32x128xf32>
    %51 = vector.broadcast %31 : vector<1x128xf32> to vector<32x128xf32>
    %52 = arith.mulf %50, %51 : vector<32x128xf32>
    %53 = vector.broadcast %32 : vector<1x128xf32> to vector<32x128xf32>
    %54 = arith.addf %52, %53 : vector<32x128xf32>
    %cst_23 = arith.constant 0.000000e+00 : f32
    %55 = vector.broadcast %cst_23 : f32 to vector<32x128xf32>
    %56 = arith.maximumf %54, %55 : vector<32x128xf32>
    %57 = arith.truncf %56 : vector<32x128xf32> to vector<32x128xbf16>
    %c0_24 = arith.constant 0 : index
    %c0_25 = arith.constant 0 : index
    %58 = vector.load %arg8[%c0_24, %c0_25] : memref<128x128xbf16, #tpu.memory_space<vmem>>, vector<128x128xbf16>
    %cst_26 = arith.constant dense<0.000000e+00> : vector<32x128xf32>
    %59 = tpu.matmul %57, %58, %cst_26 {dimension_numbers = #tpu.dot_dimension_numbers<[1], [0], [0], [1], [0, 0, 1, 1], [], []>} : vector<32x128xbf16>, vector<128x128xbf16>, vector<32x128xf32> -> vector<32x128xf32>
    %c0_27 = arith.constant 0 : index
    %c0_28 = arith.constant 0 : index
    %60 = vector.load %arg9[%c0_27, %c0_28] : memref<1x128xf32, #tpu.memory_space<vmem>>, vector<1x128xf32>
    %61 = vector.broadcast %60 : vector<1x128xf32> to vector<32x128xf32>
    %62 = arith.addf %59, %61 : vector<32x128xf32>
    %c0_29 = arith.constant 0 : index
    %c0_30 = arith.constant 0 : index
    %63 = vector.load %arg10[%c0_29, %c0_30] : memref<1x128xf32, #tpu.memory_space<vmem>>, vector<1x128xf32>
    %c0_31 = arith.constant 0 : index
    %c0_32 = arith.constant 0 : index
    %64 = vector.load %arg11[%c0_31, %c0_32] : memref<1x128xf32, #tpu.memory_space<vmem>>, vector<1x128xf32>
    %cst_33 = arith.constant dense<0.000000e+00> : vector<32xf32>
    %65 = vector.multi_reduction <add>, %62, %cst_33 [1] : vector<32x128xf32> to vector<32xf32>
    %66 = vector.shape_cast %65 : vector<32xf32> to vector<32x1xf32>
    %cst_34 = arith.constant 1.280000e+02 : f32
    %67 = vector.broadcast %cst_34 : f32 to vector<32x1xf32>
    %68 = arith.divf %66, %67 : vector<32x1xf32>
    %69 = vector.broadcast %68 : vector<32x1xf32> to vector<32x128xf32>
    %70 = arith.subf %62, %69 : vector<32x128xf32>
    %71 = arith.mulf %70, %70 : vector<32x128xf32>
    %cst_35 = arith.constant dense<0.000000e+00> : vector<32xf32>
    %72 = vector.multi_reduction <add>, %71, %cst_35 [1] : vector<32x128xf32> to vector<32xf32>
    %73 = vector.shape_cast %72 : vector<32xf32> to vector<32x1xf32>
    %cst_36 = arith.constant 1.280000e+02 : f32
    %74 = vector.broadcast %cst_36 : f32 to vector<32x1xf32>
    %75 = arith.divf %73, %74 : vector<32x1xf32>
    %76 = vector.broadcast %68 : vector<32x1xf32> to vector<32x128xf32>
    %77 = arith.subf %62, %76 : vector<32x128xf32>
    %cst_37 = arith.constant 9.99999974E-6 : f32
    %78 = vector.broadcast %cst_37 : f32 to vector<32x1xf32>
    %79 = arith.addf %75, %78 : vector<32x1xf32>
    %80 = math.rsqrt %79 : vector<32x1xf32>
    %81 = vector.broadcast %80 : vector<32x1xf32> to vector<32x128xf32>
    %82 = arith.mulf %77, %81 : vector<32x128xf32>
    %83 = vector.broadcast %63 : vector<1x128xf32> to vector<32x128xf32>
    %84 = arith.mulf %82, %83 : vector<32x128xf32>
    %85 = vector.broadcast %64 : vector<1x128xf32> to vector<32x128xf32>
    %86 = arith.addf %84, %85 : vector<32x128xf32>
    %c0_38 = arith.constant 0 : index
    %c0_39 = arith.constant 0 : index
    %87 = vector.load %arg13[%c0_38, %c0_39] : memref<17x128xf32, #tpu.memory_space<vmem>>, vector<17x128xf32>
    %c0_40 = arith.constant 0 : index
    %c0_41 = arith.constant 0 : index
    %88 = vector.load %arg12[%c0_40, %c0_41] : memref<1x128xf32, #tpu.memory_space<vmem>>, vector<1x128xf32>
    %89 = vector.extract_strided_slice %87 {offsets = [0, 0], sizes = [1, 128], strides = [1, 1]} : vector<17x128xf32> to vector<1x128xf32>
    %90 = arith.addf %88, %89 : vector<1x128xf32>
    %91 = vector.extract_strided_slice %87 {offsets = [1, 0], sizes = [16, 128], strides = [1, 1]} : vector<17x128xf32> to vector<16x128xf32>
    %92 = vector.extract_strided_slice %86 {offsets = [0, 0], sizes = [16, 128], strides = [1, 1]} : vector<32x128xf32> to vector<16x128xf32>
    %93 = arith.addf %92, %91 : vector<16x128xf32>
    %94 = tpu.concatenate %90, %93 in 0 : vector<1x128xf32>, vector<16x128xf32> -> vector<17x128xf32>
    %c0_42 = arith.constant 0 : index
    %c0_43 = arith.constant 0 : index
    %c0_44 = arith.constant 0 : index
    %95 = vector.load %arg14[%c0_42, %c0_43, %c0_44] : memref<2x17x128xf32, #tpu.memory_space<vmem>>, vector<1x17x128xf32>
    %96 = vector.shape_cast %95 : vector<1x17x128xf32> to vector<17x128xf32>
    %97 = vector.shape_cast %94 : vector<17x128xf32> to vector<1x17x128xf32>
    tpu.vector_store %arg14[%c0_42, %c0_43, %c0_44], %97 {strides = array<i32>} : memref<2x17x128xf32, #tpu.memory_space<vmem>>, vector<1x17x128xf32>,
    %98 = vector.extract_strided_slice %86 {offsets = [16, 0], sizes = [16, 128], strides = [1, 1]} : vector<32x128xf32> to vector<16x128xf32>
    %99 = arith.addf %98, %91 : vector<16x128xf32>
    %100 = tpu.concatenate %90, %99 in 0 : vector<1x128xf32>, vector<16x128xf32> -> vector<17x128xf32>
    %c1 = arith.constant 1 : index
    %c0_45 = arith.constant 0 : index
    %c0_46 = arith.constant 0 : index
    %101 = vector.load %arg14[%c1, %c0_45, %c0_46] : memref<2x17x128xf32, #tpu.memory_space<vmem>>, vector<1x17x128xf32>
    %102 = vector.shape_cast %101 : vector<1x17x128xf32> to vector<17x128xf32>
    %103 = vector.shape_cast %100 : vector<17x128xf32> to vector<1x17x128xf32>
    tpu.vector_store %arg14[%c1, %c0_45, %c0_46], %103 {strides = array<i32>} : memref<2x17x128xf32, #tpu.memory_space<vmem>>, vector<1x17x128xf32>,
    return
  }
  func.func @transform_0(%arg0: i32) -> (i32, i32) {
    %c0_i32 = arith.constant 0 : i32
    %c0_i32_0 = arith.constant 0 : i32
    %c0_i32_1 = arith.constant 0 : i32
    return %c0_i32, %c0_i32_0 : i32, i32
  }
  func.func @transform_1(%arg0: i32) -> (i32, i32) {
    %c0_i32 = arith.constant 0 : i32
    %c0_i32_0 = arith.constant 0 : i32
    %c0_i32_1 = arith.constant 0 : i32
    return %c0_i32, %c0_i32_0 : i32, i32
  }
  func.func @transform_2(%arg0: i32) -> (i32, i32) {
    %c0_i32 = arith.constant 0 : i32
    %c0_i32_0 = arith.constant 0 : i32
    %c0_i32_1 = arith.constant 0 : i32
    return %c0_i32, %c0_i32_0 : i32, i32
  }
  func.func @transform_3(%arg0: i32) -> (i32, i32) {
    %c0_i32 = arith.constant 0 : i32
    %c0_i32_0 = arith.constant 0 : i32
    %c0_i32_1 = arith.constant 0 : i32
    return %c0_i32, %c0_i32_0 : i32, i32
  }
  func.func @transform_4(%arg0: i32) -> (i32, i32) {
    %c0_i32 = arith.constant 0 : i32
    %c0_i32_0 = arith.constant 0 : i32
    %c0_i32_1 = arith.constant 0 : i32
    return %c0_i32, %c0_i32_0 : i32, i32
  }
  func.func @transform_5(%arg0: i32) -> (i32, i32) {
    %c0_i32 = arith.constant 0 : i32
    %c0_i32_0 = arith.constant 0 : i32
    %c0_i32_1 = arith.constant 0 : i32
    return %c0_i32, %c0_i32_0 : i32, i32
  }
  func.func @transform_6(%arg0: i32) -> (i32, i32) {
    %c0_i32 = arith.constant 0 : i32
    %c0_i32_0 = arith.constant 0 : i32
    %c0_i32_1 = arith.constant 0 : i32
    return %c0_i32, %c0_i32_0 : i32, i32
  }
  func.func @transform_7(%arg0: i32) -> (i32, i32) {
    %c0_i32 = arith.constant 0 : i32
    %c0_i32_0 = arith.constant 0 : i32
    %c0_i32_1 = arith.constant 0 : i32
    return %c0_i32, %c0_i32_0 : i32, i32
  }
  func.func @transform_8(%arg0: i32) -> (i32, i32) {
    %c0_i32 = arith.constant 0 : i32
    %c0_i32_0 = arith.constant 0 : i32
    %c0_i32_1 = arith.constant 0 : i32
    return %c0_i32, %c0_i32_0 : i32, i32
  }
  func.func @transform_9(%arg0: i32) -> (i32, i32) {
    %c0_i32 = arith.constant 0 : i32
    %c0_i32_0 = arith.constant 0 : i32
    %c0_i32_1 = arith.constant 0 : i32
    return %c0_i32, %c0_i32_0 : i32, i32
  }
  func.func @transform_10(%arg0: i32) -> (i32, i32) {
    %c0_i32 = arith.constant 0 : i32
    %c0_i32_0 = arith.constant 0 : i32
    %c0_i32_1 = arith.constant 0 : i32
    return %c0_i32, %c0_i32_0 : i32, i32
  }
  func.func @transform_11(%arg0: i32) -> (i32, i32) {
    %c0_i32 = arith.constant 0 : i32
    %c0_i32_0 = arith.constant 0 : i32
    %c0_i32_1 = arith.constant 0 : i32
    return %c0_i32, %c0_i32_0 : i32, i32
  }
  func.func @transform_12(%arg0: i32) -> (i32, i32) {
    %c0_i32 = arith.constant 0 : i32
    %c0_i32_0 = arith.constant 0 : i32
    %c0_i32_1 = arith.constant 0 : i32
    return %c0_i32, %c0_i32_0 : i32, i32
  }
  func.func @transform_13(%arg0: i32) -> (i32, i32, i32) {
    %c0_i32 = arith.constant 0 : i32
    %c0_i32_0 = arith.constant 0 : i32
    %c0_i32_1 = arith.constant 0 : i32
    %c0_i32_2 = arith.constant 0 : i32
    return %c0_i32, %c0_i32_0, %c0_i32_1 : i32, i32, i32
  }
}

</mosaic_0001>

<llo_original>
// kernel: tpu_custom_call.1
$region0: #{tpu_custom_call.1}
  #allocation0 [shape = 'u32[]', space=smem, size = 0x4, offset = 0x4, fixed_abs, tag = 'smem constant byte address 0x4 - core index']
  #allocation1 [shape = 'u32[144,128]{1,0:T(1,128)}', space=vmem, size = 0x12000, scoped, tag = 'internal scratch']
  %s0 = inlined_call_operand.hbm [shape: f32[32,64], index: 0, kind: input, shape index: {}]
  %s1 = inlined_call_operand.vmem [shape: f32[1,64], index: 1, kind: input, shape index: {}]
  %s2 = inlined_call_operand.vmem [shape: f32[1,64], index: 2, kind: input, shape index: {}]
  %s3 = inlined_call_operand.hbm [shape: bf16[64,128], index: 3, kind: input, shape index: {}]
  %s4 = inlined_call_operand.vmem [shape: f32[1,128], index: 4, kind: input, shape index: {}]
  %s5 = inlined_call_operand.vmem [shape: f32[1,128], index: 5, kind: input, shape index: {}]
  %s6 = inlined_call_operand.vmem [shape: f32[1,128], index: 6, kind: input, shape index: {}]
  %s7 = inlined_call_operand.hbm [shape: bf16[128,128], index: 7, kind: input, shape index: {}]
  %s8 = inlined_call_operand.vmem [shape: f32[1,128], index: 8, kind: input, shape index: {}]
  %s9 = inlined_call_operand.vmem [shape: f32[1,128], index: 9, kind: input, shape index: {}]
  %s10 = inlined_call_operand.vmem [shape: f32[1,128], index: 10, kind: input, shape index: {}]
  %s11 = inlined_call_operand.vmem [shape: f32[1,128], index: 11, kind: input, shape index: {}]
  %s12 = inlined_call_operand.vmem [shape: f32[17,128], index: 12, kind: input, shape index: {}]
  %s13 = inlined_call_operand.vmem [shape: f32[2,17,128], index: 13, kind: output, shape index: {}]
  %s14 = sld [smem:[#allocation0]]
  $region74: #{tpu_custom_call.1} parent=0
    _
  %s16 = ssub.s32 1, %s14
  %s17 = scalar_select 0, %s16, %s14
  $region1: #{tpu_custom_call.1} parent=0
    #allocation2 [shape = 'u8[16384]{0}', space=vmem, size = 0x4000, scoped, tag = 'input window, operand 0, single buffered']
    #allocation3 [shape = 's32[1]{0}', space=sflag, size = 0x4, scoped, tag = 'scoped memory for tpu_custom_call.1']
    #allocation4 [shape = 'u8[16384]{0}', space=vmem, size = 0x4000, scoped, tag = 'input window, operand 3, single buffered']
    #allocation5 [shape = 's32[1]{0}', space=sflag, size = 0x4, scoped, tag = 'scoped memory for tpu_custom_call.1']
    #allocation6 [shape = 'u8[32768]{0}', space=vmem, size = 0x8000, scoped, tag = 'input window, operand 7, single buffered']
    %18 = vsyncpa [#allocation3], 0
    %19 = vsyncpa [#allocation5], 0
    // Predicated region
    $region2: #{tpu_custom_call.1} parent=1 // pred_check
      _
    $region3: #{tpu_custom_call.1} parent=1 // pred_check_branch
      %21 = sbr.rel (0) target = $region5
    $region4: #{tpu_custom_call.1} parent=1 // pred_region
      %s23 = ssub.s32 512, 512
      %24 = vsyncadd [#allocation3], %s23
      %s25 = sshll.u32 [#allocation2], 4
      %s26 = int_to_ptr.vmem [resolvable:$true] %s25
      %31 = dma.hbm_to_vmem [thread:$0]  %s0, 512, %s26, [#allocation3], 128, 128, 8
    $region5: #{tpu_custom_call.1} parent=1 // pred_fallthru
      _
    // Predicated region
    $region6: #{tpu_custom_call.1} parent=1 // pred_check
      _
    $region7: #{tpu_custom_call.1} parent=1 // pred_check_branch
      %33 = sbr.rel (0) target = $region9
    $region8: #{tpu_custom_call.1} parent=1 // pred_region
      _
    $region9: #{tpu_custom_call.1} parent=1 // pred_fallthru
      _
    // Predicated region
    $region10: #{tpu_custom_call.1} parent=1 // pred_check
      _
    $region11: #{tpu_custom_call.1} parent=1 // pred_check_branch
      %35 = sbr.rel (0) target = $region13
    $region12: #{tpu_custom_call.1} parent=1 // pred_region
      _
    $region13: #{tpu_custom_call.1} parent=1 // pred_fallthru
      _
    // Predicated region
    $region14: #{tpu_custom_call.1} parent=1 // pred_check
      _
    $region15: #{tpu_custom_call.1} parent=1 // pred_check_branch
      %37 = sbr.rel (0) target = $region17
    $region16: #{tpu_custom_call.1} parent=1 // pred_region
      %s39 = ssub.s32 512, 512
      %40 = vsyncadd [#allocation5], %s39
      %s41 = sshll.u32 [#allocation4], 4
      %s42 = int_to_ptr.vmem [resolvable:$true] %s41
      %47 = dma.hbm_to_vmem [thread:$0]  %s3, 512, %s42, [#allocation5], 64, 64, 4
    $region17: #{tpu_custom_call.1} parent=1 // pred_fallthru
      _
    // Predicated region
    $region18: #{tpu_custom_call.1} parent=1 // pred_check
      _
    $region19: #{tpu_custom_call.1} parent=1 // pred_check_branch
      %49 = sbr.rel (0) target = $region21
    $region20: #{tpu_custom_call.1} parent=1 // pred_region
      _
    $region21: #{tpu_custom_call.1} parent=1 // pred_fallthru
      _
    // Predicated region
    $region22: #{tpu_custom_call.1} parent=1 // pred_check
      _
    $region23: #{tpu_custom_call.1} parent=1 // pred_check_branch
      %51 = sbr.rel (0) target = $region25
    $region24: #{tpu_custom_call.1} parent=1 // pred_region
      _
    $region25: #{tpu_custom_call.1} parent=1 // pred_fallthru
      _
    // Predicated region
    $region26: #{tpu_custom_call.1} parent=1 // pred_check
      _
    $region27: #{tpu_custom_call.1} parent=1 // pred_check_branch
      %53 = sbr.rel (0) target = $region29
    $region28: #{tpu_custom_call.1} parent=1 // pred_region
      _
    $region29: #{tpu_custom_call.1} parent=1 // pred_fallthru
      _
    // Predicated region
    $region30: #{tpu_custom_call.1} parent=1 // pred_check
      _
    $region31: #{tpu_custom_call.1} parent=1 // pred_check_branch
      %55 = sbr.rel (0) target = $region33
    $region32: #{tpu_custom_call.1} parent=1 // pred_region
      %s57 = ssub.s32 1024, 1024
      %58 = vsyncadd [#allocation5], %s57
      %s59 = sshll.u32 [#allocation6], 4
      %s60 = int_to_ptr.vmem [resolvable:$true] %s59
      %65 = dma.hbm_to_vmem [thread:$0]  %s7, 1024, %s60, [#allocation5], 64, 64, 4
    $region33: #{tpu_custom_call.1} parent=1 // pred_fallthru
      _
    // Predicated region
    $region34: #{tpu_custom_call.1} parent=1 // pred_check
      _
    $region35: #{tpu_custom_call.1} parent=1 // pred_check_branch
      %67 = sbr.rel (0) target = $region37
    $region36: #{tpu_custom_call.1} parent=1 // pred_region
      _
    $region37: #{tpu_custom_call.1} parent=1 // pred_fallthru
      _
    // Predicated region
    $region38: #{tpu_custom_call.1} parent=1 // pred_check
      _
    $region39: #{tpu_custom_call.1} parent=1 // pred_check_branch
      %69 = sbr.rel (0) target = $region41
    $region40: #{tpu_custom_call.1} parent=1 // pred_region
      _
    $region41: #{tpu_custom_call.1} parent=1 // pred_fallthru
      _
    // Predicated region
    $region42: #{tpu_custom_call.1} parent=1 // pred_check
      _
    $region43: #{tpu_custom_call.1} parent=1 // pred_check_branch
      %71 = sbr.rel (0) target = $region45
    $region44: #{tpu_custom_call.1} parent=1 // pred_region
      _
    $region45: #{tpu_custom_call.1} parent=1 // pred_fallthru
      _
    // Predicated region
    $region46: #{tpu_custom_call.1} parent=1 // pred_check
      _
    $region47: #{tpu_custom_call.1} parent=1 // pred_check_branch
      %73 = sbr.rel (0) target = $region49
    $region48: #{tpu_custom_call.1} parent=1 // pred_region
      _
    $region49: #{tpu_custom_call.1} parent=1 // pred_fallthru
      _
    // Predicated region
    $region50: #{tpu_custom_call.1} parent=1 // pred_check
      _
    $region51: #{tpu_custom_call.1} parent=1 // pred_check_branch
      %75 = sbr.rel (0) target = $region53
    $region52: #{tpu_custom_call.1} parent=1 // pred_region
      _
    $region53: #{tpu_custom_call.1} parent=1 // pred_fallthru
      _
    // Predicated region
    $region54: #{tpu_custom_call.1} parent=1 // pred_check
      _
    $region55: #{tpu_custom_call.1} parent=1 // pred_check_branch
      %77 = sbr.rel (0) target = $region57
    $region56: #{tpu_custom_call.1} parent=1 // pred_region
      %78 = dma.done [#allocation3], 512
    $region57: #{tpu_custom_call.1} parent=1 // pred_fallthru
      _
    // Predicated region
    $region58: #{tpu_custom_call.1} parent=1 // pred_check
      _
    $region59: #{tpu_custom_call.1} parent=1 // pred_check_branch
      %80 = sbr.rel (0) target = $region61
    $region60: #{tpu_custom_call.1} parent=1 // pred_region
      %81 = dma.done [#allocation5], 512
    $region61: #{tpu_custom_call.1} parent=1 // pred_fallthru
      _
    // Predicated region
    $region62: #{tpu_custom_call.1} parent=1 // pred_check
      _
    $region63: #{tpu_custom_call.1} parent=1 // pred_check_branch
      %83 = sbr.rel (0) target = $region65
    $region64: #{tpu_custom_call.1} parent=1 // pred_region
      %84 = dma.done [#allocation5], 1024
    $region65: #{tpu_custom_call.1} parent=1 // pred_fallthru
      _
    %v86 = vld [vmem:[#allocation2] sm:$0xff]
    %v87 = vld [vmem:[#allocation2 + $0x8] sm:$0xff]
    %v88 = vld [vmem:[#allocation2 + $0x10] sm:$0xff]
    %v89 = vld [vmem:[#allocation2 + $0x18] sm:$0xff]
    %v90 = vld [vmem:[%s1] sm:$0x1]
    %v91 = vld [vmem:[%s2] sm:$0x1]
    %vm92 = vcmask 523264
    %v93 = vsel %vm92, %v86, 0.0
    %94 = vadd.xlane.f32.xlu0 %v93
    %v95 = vpop.xlane.xlu0 %94
    %v96 = vsel %vm92, %v87, 0.0
    %97 = vadd.xlane.f32.xlu0 %v96
    %v98 = vpop.xlane.xlu0 %97
    %v99 = vsel %vm92, %v88, 0.0
    %100 = vadd.xlane.f32.xlu0 %v99
    %v101 = vpop.xlane.xlu0 %100
    %v102 = vsel %vm92, %v89, 0.0
    %103 = vadd.xlane.f32.xlu0 %v102
    %v104 = vpop.xlane.xlu0 %103
    %v105 = vrcp.pop 64.0
    %v106 = vmul.f32 %v95, %v105
    %v107 = vmul.f32 %v98, %v105
    %v108 = vmul.f32 %v101, %v105
    %v109 = vmul.f32 %v104, %v105
    %v110 = vsub.f32 %v86, %v106
    %v111 = vsub.f32 %v87, %v107
    %v112 = vsub.f32 %v88, %v108
    %v113 = vsub.f32 %v89, %v109
    %v114 = vmul.f32 %v110, %v110
    %v115 = vmul.f32 %v111, %v111
    %v116 = vmul.f32 %v112, %v112
    %v117 = vmul.f32 %v113, %v113
    %v118 = vsel %vm92, %v114, 0.0
    %119 = vadd.xlane.f32.xlu0 %v118
    %v120 = vpop.xlane.xlu0 %119
    %v121 = vsel %vm92, %v115, 0.0
    %122 = vadd.xlane.f32.xlu0 %v121
    %v123 = vpop.xlane.xlu0 %122
    %v124 = vsel %vm92, %v116, 0.0
    %125 = vadd.xlane.f32.xlu0 %v124
    %v126 = vpop.xlane.xlu0 %125
    %v127 = vsel %vm92, %v117, 0.0
    %128 = vadd.xlane.f32.xlu0 %v127
    %v129 = vpop.xlane.xlu0 %128
    %v130 = vmul.f32 %v120, %v105
    %v131 = vmul.f32 %v123, %v105
    %v132 = vmul.f32 %v126, %v105
    %v133 = vmul.f32 %v129, %v105
    %v134 = vadd.f32 %v130, 1e-05
    %v135 = vadd.f32 %v131, 1e-05
    %v136 = vadd.f32 %v132, 1e-05
    %v137 = vadd.f32 %v133, 1e-05
    %v138 = vrsqrt.pop %v134
    %v139 = vrsqrt.pop %v135
    %v140 = vrsqrt.pop %v136
    %v141 = vrsqrt.pop %v137
    %v142 = vmul.f32 %v110, %v138
    %v143 = vmul.f32 %v111, %v139
    %v144 = vmul.f32 %v112, %v140
    %v145 = vmul.f32 %v113, %v141
    %v147 = vlaneseq
    %v148 = vshrl.u32 %v147, 7
    %v149 = vsub.s32 0, %v148
    %v150 = vrot.slane %v90, %v149
    %v152 = vmul.f32 %v142, %v150
    %v153 = vmul.f32 %v143, %v150
    %v154 = vmul.f32 %v144, %v150
    %v155 = vmul.f32 %v145, %v150
    %v157 = vlaneseq
    %v158 = vshrl.u32 %v157, 7
    %v159 = vsub.s32 0, %v158
    %v160 = vrot.slane %v91, %v159
    %v162 = vadd.f32 %v152, %v160
    %v163 = vadd.f32 %v153, %v160
    %v164 = vadd.f32 %v154, %v160
    %v165 = vadd.f32 %v155, %v160
    %v166 = vpack.c.bf16 %v163, %v162
    %v167 = vpack.c.bf16 %v165, %v164
    %v168 = vld [vmem:[#allocation4] sm:$0xf]
    %v169 = vld [vmem:[#allocation4 + $0x4] sm:$0xf]
    %v170 = vld [vmem:[#allocation4 + $0x8] sm:$0xf]
    %v171 = vld [vmem:[#allocation4 + $0xc] sm:$0xf]
    %v172 = vld [vmem:[#allocation4 + $0x10] sm:$0xf]
    %v173 = vld [vmem:[#allocation4 + $0x14] sm:$0xf]
    %v174 = vld [vmem:[#allocation4 + $0x18] sm:$0xf]
    %v175 = vld [vmem:[#allocation4 + $0x1c] sm:$0xf]
    %v176 = vld [vmem:[%s4] sm:$0x1]
    %v178 = vlaneseq
    %v179 = vshrl.u32 %v178, 7
    %v180 = vsub.s32 0, %v179
    %v181 = vrot.slane %v176, %v180
    %v191 = vunpack.c.l.b16 %v168
    %v192 = vunpack.c.l.b16 %v169
    %v193 = vunpack.c.l.b16 %v170
    %v194 = vunpack.c.l.b16 %v171
    %v195 = vunpack.c.l.b16 %v172
    %v196 = vunpack.c.l.b16 %v173
    %v197 = vunpack.c.l.b16 %v174
    %v198 = vunpack.c.l.b16 %v175
    %v199 = vpack.c.b16 %v192, %v191
    %v200 = vpack.c.b16 %v194, %v193
    %v201 = vpack.c.b16 %v196, %v195
    %v202 = vpack.c.b16 %v198, %v197
    %v208 = vsel %vm92, %v166, 0
    %v211 = vsel %vm92, %v167, 0
    %213 = vmatprep.subr.bf16.mxu0 0
    %214 = vmatpush1.bf16.msra.mxu0 %v199
    %215 = vmatprep.subr.bf16.mxu0 0
    %216 = vmatpush1.bf16.msra.mxu0 %v200
    %217 = vmatprep.subr.bf16.mxu0 0
    %218 = vmatpush1.bf16.msra.mxu0 %v201
    %219 = vmatprep.subr.bf16.mxu0 0
    %220 = vmatpush1.bf16.msra.mxu0 %v202
    %221 = vmatprep.subr.bf16.mxu0 0
    %222 = vmatpush1.bf16.msra.mxu0 0
    %223 = vmatprep.subr.bf16.mxu0 0
    %224 = vmatpush1.bf16.msra.mxu0 0
    %225 = vmatprep.subr.bf16.mxu0 0
    %226 = vmatpush1.bf16.msra.mxu0 0
    %227 = vmatprep.subr.bf16.mxu0 0
    %228 = vmatpush1.bf16.msra.mxu0 0
    %229 = vmatprep.subr.bf16.mxu0 0
    %230 = vmatpush1.bf16.msra.mxu0 0
    %231 = vmatprep.subr.bf16.mxu0 0
    %232 = vmatpush1.bf16.msra.mxu0 0
    %233 = vmatprep.subr.bf16.mxu0 0
    %234 = vmatpush1.bf16.msra.mxu0 0
    %235 = vmatprep.subr.bf16.mxu0 0
    %236 = vmatpush1.bf16.msra.mxu0 0
    %237 = vmatprep.subr.bf16.mxu0 0
    %238 = vmatpush1.bf16.msra.mxu0 0
    %239 = vmatprep.subr.bf16.mxu0 0
    %240 = vmatpush1.bf16.msra.mxu0 0
    %241 = vmatprep.subr.bf16.mxu0 0
    %242 = vmatpush1.bf16.msra.mxu0 0
    %243 = vmatprep.subr.bf16.mxu0 0
    %244 = vmatpush1.bf16.msra.mxu0 0
    %245 = vmatprep.mubr.bf16.mxu0 0
    %246 = vmatmul.mubr.bf16.gmra.mrb[0].mxu0 %v208
    %v247 = vpop.f32.mrb[0].mxu0
    %v248 = vadd.f32 %v181, %v247
    %v249 = vpop.f32.mrb[0].mxu0
    %v250 = vpop.f32.mrb[0].mxu0
    %v251 = vadd.f32 %v181, %v250
    %v252 = vpop.f32.mrb[0].mxu0
    %253 = vmatprep.mubr.bf16.mxu0 0
    %254 = vmatmul.mubr.bf16.gmra.mrb[0].mxu0 %v211
    %v255 = vpop.f32.mrb[0].mxu0
    %v256 = vadd.f32 %v181, %v255
    %v257 = vpop.f32.mrb[0].mxu0
    %v258 = vpop.f32.mrb[0].mxu0
    %v259 = vadd.f32 %v181, %v258
    %v260 = vpop.f32.mrb[0].mxu0
    %261 = vdwg.mxu0
    %v262 = vld [vmem:[%s5] sm:$0x1]
    %v263 = vld [vmem:[%s6] sm:$0x1]
    %264 = vadd.xlane.f32.xlu0 %v248
    %v265 = vpop.xlane.xlu0 %264
    %266 = vadd.xlane.f32.xlu0 %v251
    %v267 = vpop.xlane.xlu0 %266
    %268 = vadd.xlane.f32.xlu0 %v256
    %v269 = vpop.xlane.xlu0 %268
    %270 = vadd.xlane.f32.xlu0 %v259
    %v271 = vpop.xlane.xlu0 %270
    %v272 = vrcp.pop 128.0
    %v273 = vmul.f32 %v265, %v272
    %v274 = vmul.f32 %v267, %v272
    %v275 = vmul.f32 %v269, %v272
    %v276 = vmul.f32 %v271, %v272
    %v277 = vsub.f32 %v248, %v273
    %v278 = vsub.f32 %v251, %v274
    %v279 = vsub.f32 %v256, %v275
    %v280 = vsub.f32 %v259, %v276
    %v281 = vmul.f32 %v277, %v277
    %v282 = vmul.f32 %v278, %v278
    %v283 = vmul.f32 %v279, %v279
    %v284 = vmul.f32 %v280, %v280
    %285 = vadd.xlane.f32.xlu0 %v281
    %v286 = vpop.xlane.xlu0 %285
    %287 = vadd.xlane.f32.xlu0 %v282
    %v288 = vpop.xlane.xlu0 %287
    %289 = vadd.xlane.f32.xlu0 %v283
    %v290 = vpop.xlane.xlu0 %289
    %291 = vadd.xlane.f32.xlu0 %v284
    %v292 = vpop.xlane.xlu0 %291
    %v293 = vmul.f32 %v286, %v272
    %v294 = vmul.f32 %v288, %v272
    %v295 = vmul.f32 %v290, %v272
    %v296 = vmul.f32 %v292, %v272
    %v297 = vadd.f32 %v293, 1e-05
    %v298 = vadd.f32 %v294, 1e-05
    %v299 = vadd.f32 %v295, 1e-05
    %v300 = vadd.f32 %v296, 1e-05
    %v301 = vrsqrt.pop %v297
    %v302 = vrsqrt.pop %v298
    %v303 = vrsqrt.pop %v299
    %v304 = vrsqrt.pop %v300
    %v305 = vmul.f32 %v277, %v301
    %v306 = vmul.f32 %v278, %v302
    %v307 = vmul.f32 %v279, %v303
    %v308 = vmul.f32 %v280, %v304
    %v310 = vlaneseq
    %v311 = vshrl.u32 %v310, 7
    %v312 = vsub.s32 0, %v311
    %v313 = vrot.slane %v262, %v312
    %v315 = vmul.f32 %v305, %v313
    %v316 = vmul.f32 %v306, %v313
    %v317 = vmul.f32 %v307, %v313
    %v318 = vmul.f32 %v308, %v313
    %v320 = vlaneseq
    %v321 = vshrl.u32 %v320, 7
    %v322 = vsub.s32 0, %v321
    %v323 = vrot.slane %v263, %v322
    %v325 = vadd.f32 %v315, %v323
    %v326 = vadd.f32 %v316, %v323
    %v327 = vadd.f32 %v317, %v323
    %v328 = vadd.f32 %v318, %v323
    %v329 = vmax.f32 %v325, 0.0
    %v330 = vmax.f32 %v326, 0.0
    %v331 = vmax.f32 %v327, 0.0
    %v332 = vmax.f32 %v328, 0.0
    %v333 = vpack.c.bf16 %v330, %v329
    %v334 = vpack.c.bf16 %v332, %v331
    %v335 = vld [vmem:[#allocation6] sm:$0xf]
    %v336 = vld [vmem:[#allocation6 + $0x4] sm:$0xf]
    %v337 = vld [vmem:[#allocation6 + $0x8] sm:$0xf]
    %v338 = vld [vmem:[#allocation6 + $0xc] sm:$0xf]
    %v339 = vld [vmem:[#allocation6 + $0x10] sm:$0xf]
    %v340 = vld [vmem:[#allocation6 + $0x14] sm:$0xf]
    %v341 = vld [vmem:[#allocation6 + $0x18] sm:$0xf]
    %v342 = vld [vmem:[#allocation6 + $0x1c] sm:$0xf]
    %v343 = vld [vmem:[#allocation6 + $0x20] sm:$0xf]
    %v344 = vld [vmem:[#allocation6 + $0x24] sm:$0xf]
    %v345 = vld [vmem:[#allocation6 + $0x28] sm:$0xf]
    %v346 = vld [vmem:[#allocation6 + $0x2c] sm:$0xf]
    %v347 = vld [vmem:[#allocation6 + $0x30] sm:$0xf]
    %v348 = vld [vmem:[#allocation6 + $0x34] sm:$0xf]
    %v349 = vld [vmem:[#allocation6 + $0x38] sm:$0xf]
    %v350 = vld [vmem:[#allocation6 + $0x3c] sm:$0xf]
    %v351 = vld [vmem:[%s8] sm:$0x1]
    %v353 = vlaneseq
    %v354 = vshrl.u32 %v353, 7
    %v355 = vsub.s32 0, %v354
    %v356 = vrot.slane %v351, %v355
    %v374 = vunpack.c.l.b16 %v335
    %v375 = vunpack.c.l.b16 %v336
    %v376 = vunpack.c.l.b16 %v337
    %v377 = vunpack.c.l.b16 %v338
    %v378 = vunpack.c.l.b16 %v339
    %v379 = vunpack.c.l.b16 %v340
    %v380 = vunpack.c.l.b16 %v341
    %v381 = vunpack.c.l.b16 %v342
    %v382 = vunpack.c.l.b16 %v343
    %v383 = vunpack.c.l.b16 %v344
    %v384 = vunpack.c.l.b16 %v345
    %v385 = vunpack.c.l.b16 %v346
    %v386 = vunpack.c.l.b16 %v347
    %v387 = vunpack.c.l.b16 %v348
    %v388 = vunpack.c.l.b16 %v349
    %v389 = vunpack.c.l.b16 %v350
    %v390 = vpack.c.b16 %v375, %v374
    %v391 = vpack.c.b16 %v377, %v376
    %v392 = vpack.c.b16 %v379, %v378
    %v393 = vpack.c.b16 %v381, %v380
    %v394 = vpack.c.b16 %v383, %v382
    %v395 = vpack.c.b16 %v385, %v384
    %v396 = vpack.c.b16 %v387, %v386
    %v397 = vpack.c.b16 %v389, %v388
    %406 = vmatprep.subr.bf16.mxu0 0
    %407 = vmatpush1.bf16.msra.mxu0 %v390
    %408 = vmatprep.subr.bf16.mxu0 0
    %409 = vmatpush1.bf16.msra.mxu0 %v391
    %410 = vmatprep.subr.bf16.mxu0 0
    %411 = vmatpush1.bf16.msra.mxu0 %v392
    %412 = vmatprep.subr.bf16.mxu0 0
    %413 = vmatpush1.bf16.msra.mxu0 %v393
    %414 = vmatprep.subr.bf16.mxu0 0
    %415 = vmatpush1.bf16.msra.mxu0 %v394
    %416 = vmatprep.subr.bf16.mxu0 0
    %417 = vmatpush1.bf16.msra.mxu0 %v395
    %418 = vmatprep.subr.bf16.mxu0 0
    %419 = vmatpush1.bf16.msra.mxu0 %v396
    %420 = vmatprep.subr.bf16.mxu0 0
    %421 = vmatpush1.bf16.msra.mxu0 %v397
    %422 = vmatprep.subr.bf16.mxu0 0
    %423 = vmatpush1.bf16.msra.mxu0 0
    %424 = vmatprep.subr.bf16.mxu0 0
    %425 = vmatpush1.bf16.msra.mxu0 0
    %426 = vmatprep.subr.bf16.mxu0 0
    %427 = vmatpush1.bf16.msra.mxu0 0
    %428 = vmatprep.subr.bf16.mxu0 0
    %429 = vmatpush1.bf16.msra.mxu0 0
    %430 = vmatprep.subr.bf16.mxu0 0
    %431 = vmatpush1.bf16.msra.mxu0 0
    %432 = vmatprep.subr.bf16.mxu0 0
    %433 = vmatpush1.bf16.msra.mxu0 0
    %434 = vmatprep.subr.bf16.mxu0 0
    %435 = vmatpush1.bf16.msra.mxu0 0
    %436 = vmatprep.subr.bf16.mxu0 0
    %437 = vmatpush1.bf16.msra.mxu0 0
    %438 = vmatprep.mubr.bf16.mxu0 0
    %439 = vmatmul.mubr.bf16.gmra.mrb[0].mxu0 %v333
    %v440 = vpop.f32.mrb[0].mxu0
    %v441 = vadd.f32 %v356, %v440
    %v442 = vpop.f32.mrb[0].mxu0
    %v443 = vpop.f32.mrb[0].mxu0
    %v444 = vadd.f32 %v356, %v443
    %v445 = vpop.f32.mrb[0].mxu0
    %446 = vmatprep.mubr.bf16.mxu0 0
    %447 = vmatmul.mubr.bf16.gmra.mrb[0].mxu0 %v334
    %v448 = vpop.f32.mrb[0].mxu0
    %v449 = vadd.f32 %v356, %v448
    %v450 = vpop.f32.mrb[0].mxu0
    %v451 = vpop.f32.mrb[0].mxu0
    %v452 = vadd.f32 %v356, %v451
    %v453 = vpop.f32.mrb[0].mxu0
    %454 = vdwg.mxu0
    %v455 = vld [vmem:[%s9] sm:$0x1]
    %v456 = vld [vmem:[%s10] sm:$0x1]
    %457 = vadd.xlane.f32.xlu0 %v441
    %v458 = vpop.xlane.xlu0 %457
    %459 = vadd.xlane.f32.xlu0 %v444
    %v460 = vpop.xlane.xlu0 %459
    %461 = vadd.xlane.f32.xlu0 %v449
    %v462 = vpop.xlane.xlu0 %461
    %463 = vadd.xlane.f32.xlu0 %v452
    %v464 = vpop.xlane.xlu0 %463
    %v465 = vmul.f32 %v458, %v272
    %v466 = vmul.f32 %v460, %v272
    %v467 = vmul.f32 %v462, %v272
    %v468 = vmul.f32 %v464, %v272
    %v469 = vsub.f32 %v441, %v465
    %v470 = vsub.f32 %v444, %v466
    %v471 = vsub.f32 %v449, %v467
    %v472 = vsub.f32 %v452, %v468
    %v473 = vmul.f32 %v469, %v469
    %v474 = vmul.f32 %v470, %v470
    %v475 = vmul.f32 %v471, %v471
    %v476 = vmul.f32 %v472, %v472
    %477 = vadd.xlane.f32.xlu0 %v473
    %v478 = vpop.xlane.xlu0 %477
    %479 = vadd.xlane.f32.xlu0 %v474
    %v480 = vpop.xlane.xlu0 %479
    %481 = vadd.xlane.f32.xlu0 %v475
    %v482 = vpop.xlane.xlu0 %481
    %483 = vadd.xlane.f32.xlu0 %v476
    %v484 = vpop.xlane.xlu0 %483
    %v485 = vmul.f32 %v478, %v272
    %v486 = vmul.f32 %v480, %v272
    %v487 = vmul.f32 %v482, %v272
    %v488 = vmul.f32 %v484, %v272
    %v489 = vadd.f32 %v485, 1e-05
    %v490 = vadd.f32 %v486, 1e-05
    %v491 = vadd.f32 %v487, 1e-05
    %v492 = vadd.f32 %v488, 1e-05
    %v493 = vrsqrt.pop %v489
    %v494 = vrsqrt.pop %v490
    %v495 = vrsqrt.pop %v491
    %v496 = vrsqrt.pop %v492
    %v497 = vmul.f32 %v469, %v493
    %v498 = vmul.f32 %v470, %v494
    %v499 = vmul.f32 %v471, %v495
    %v500 = vmul.f32 %v472, %v496
    %v502 = vlaneseq
    %v503 = vshrl.u32 %v502, 7
    %v504 = vsub.s32 0, %v503
    %v505 = vrot.slane %v455, %v504
    %v507 = vmul.f32 %v497, %v505
    %v508 = vmul.f32 %v498, %v505
    %v509 = vmul.f32 %v499, %v505
    %v510 = vmul.f32 %v500, %v505
    %v512 = vlaneseq
    %v513 = vshrl.u32 %v512, 7
    %v514 = vsub.s32 0, %v513
    %v515 = vrot.slane %v456, %v514
    %v517 = vadd.f32 %v507, %v515
    %v518 = vadd.f32 %v508, %v515
    %v519 = vadd.f32 %v509, %v515
    %v520 = vadd.f32 %v510, %v515
    %v521 = vld [vmem:[%s12] sm:$0xff]
    %v522 = vld [vmem:[%s12 + $0x8] sm:$0xff]
    %v523 = vld [vmem:[%s12 + $0x10] sm:$0x1]
    %v524 = vld [vmem:[%s11] sm:$0x1]
    %v525 = vadd.f32 %v524, %v521
    %vm529 = vcmask 1046528
    %v530 = vrot.slane %v521, 1
    %v531 = vrot.slane %v522, 1
    %v532 = vsel %vm529, %v530, %v531
    %v533 = vrot.slane %v523, 1
    %v534 = vsel %vm529, %v531, %v533
    %v537 = vadd.f32 %v517, %v532
    %v538 = vadd.f32 %v518, %v534
    %vm541 = vcmask 1040384
    %v542 = vrot.slane %v537, 7
    %v543 = vrot.slane %v538, 7
    %v544 = vsel %vm541, %v542, %v543
    %v548 = vsel %vm541, %v525, %v542
    %549 = vst [vmem:[%s13] sm:$0xff] %v548
    %550 = vst [vmem:[%s13 + $0x8] sm:$0xff] %v544
    %551 = vst [vmem:[%s13 + $0x10] sm:$0x1] %v543
    %v552 = vadd.f32 %v519, %v532
    %v553 = vadd.f32 %v520, %v534
    %v556 = vrot.slane %v552, 7
    %v557 = vrot.slane %v553, 7
    %v558 = vsel %vm541, %v556, %v557
    %v562 = vsel %vm541, %v525, %v556
    %s563 = scalar_lea.vmem %s13, 24
    %564 = vst [vmem:[%s563] sm:$0xff] %v562
    %565 = vst [vmem:[%s563 + $0x8] sm:$0xff] %v558
    %566 = vst [vmem:[%s563 + $0x10] sm:$0x1] %v557
    // Predicated region
    $region66: #{tpu_custom_call.1} parent=1 // pred_check
      _
    $region67: #{tpu_custom_call.1} parent=1 // pred_check_branch
      %568 = sbr.rel (0) target = $region69
    $region68: #{tpu_custom_call.1} parent=1 // pred_region
      _
    $region69: #{tpu_custom_call.1} parent=1 // pred_fallthru
      _
    // Predicated region
    $region70: #{tpu_custom_call.1} parent=1 // pred_check
      _
    $region71: #{tpu_custom_call.1} parent=1 // pred_check_branch
      %570 = sbr.rel (0) target = $region73
    $region72: #{tpu_custom_call.1} parent=1 // pred_region
      _
    $region73: #{tpu_custom_call.1} parent=1 // pred_fallthru
      _
    %571 = vsyncpa [#allocation3], 1
    %572 = vsyncpa [#allocation5], 1

</llo_original>
